<compile_context>
chip_gen: v6e
topology: v6e:2x2x1
jax: 0.10.0
libtpu: 0.0.40
codegen_flags: <defaults>
</compile_context>

<pallas_src>
import jax
import jax.numpy as jnp
from jax import lax
from jax.experimental import pallas as pl
from jax.experimental.pallas import tpu as pltpu

_LANES = 128


def _make_z_kernel(width):
    """Kernel over lane-dense (1, TILE_R, 128) blocks of the flattened image."""
    w_f = float(width)
    inv_w = 1.0 / w_f

    def kernel(par_ref,      # SMEM f32 (B, 8): [r20, r21, r22, tz, 1/fu, 1/fv, cu, cv]
               depth_ref,    # VMEM f32 (1, TILE_R, 128) flattened depth tile
               z_ref):       # VMEM f32 (1, TILE_R, 128) output Z tile
        b = pl.program_id(0)
        t = pl.program_id(1)

        r20 = par_ref[b, 0]
        r21 = par_ref[b, 1]
        r22 = par_ref[b, 2]
        tz = par_ref[b, 3]
        inv_fu = par_ref[b, 4]
        inv_fv = par_ref[b, 5]
        cu = par_ref[b, 6]
        cv = par_ref[b, 7]

        _, tile_r, lanes = z_ref.shape

        # Flat pixel index of every element of this tile (exact in f32 for
        # images up to 2**24 pixels).
        row = lax.broadcasted_iota(jnp.int32, (tile_r, lanes), 0)
        lane = lax.broadcasted_iota(jnp.int32, (tile_r, lanes), 1)
        flat_i = t * (tile_r * lanes) + row * lanes + lane
        flat = flat_i.astype(jnp.float32)

        # v = flat // W, u = flat % W via reciprocal multiply + robust
        # off-by-one correction (guards against rounding of 1/W).
        v = jnp.floor(flat * inv_w)
        u = flat - v * w_f
        too_hi = u >= w_f
        v = jnp.where(too_hi, v + 1.0, v)
        u = jnp.where(too_hi, u - w_f, u)
        too_lo = u < 0.0
        v = jnp.where(too_lo, v - 1.0, v)
        u = jnp.where(too_lo, u + w_f, u)

        x_cam = (u - cu) * inv_fu
        y_cam = (v - cv) * inv_fv

        d = depth_ref[0]
        z_ref[0] = d * (r20 * x_cam + r21 * y_cam + r22) + tz

    return kernel


def covisual_loss(pts_for_loss, pts_for_loss_near, pred, pred_near,
                  R_mat, t_vec, proj_k):
    """pts_*: (B, N, 2) int (u, v); pred/pred_near: (B, 1, H, W) float32.

    Returns (loss, Z_near) with Z_near shaped (B, 1, H, W).
    """
    B, C, H, W = pred.shape
    assert C == 1

    # ---- lane-dense flattening of the depth plane -----------------------------
    P = H * W
    r_raw = pl.cdiv(P, _LANES)
    tile_r = min(2048, ((r_raw + 7) // 8) * 8)        # <=1 MiB per block, 8-aligned
    r_pad = ((r_raw + tile_r - 1) // tile_r) * tile_r
    n_tiles = r_pad // tile_r

    depth_flat = jnp.pad(pred[:, 0].reshape(B, P),
                         ((0, 0), (0, r_pad * _LANES - P)))
    depth_flat = depth_flat.reshape(B, r_pad, _LANES)

    # ---- per-batch scalars (row 2 of R, t_z, intrinsics) into SMEM ------------
    fu, fv = proj_k[0, 0], proj_k[1, 1]
    cu, cv = proj_k[0, 2], proj_k[1, 2]
    params = jnp.stack(
        [R_mat[:, 2, 0], R_mat[:, 2, 1], R_mat[:, 2, 2], t_vec[:, 2],
         jnp.broadcast_to(1.0 / fu, (B,)), jnp.broadcast_to(1.0 / fv, (B,)),
         jnp.broadcast_to(cu, (B,)), jnp.broadcast_to(cv, (B,))],
        axis=1).astype(jnp.float32)                                    # (B, 8)

    grid_spec = pltpu.PrefetchScalarGridSpec(
        num_scalar_prefetch=0,
        grid=(B, n_tiles),
        in_specs=[
            pl.BlockSpec(memory_space=pltpu.MemorySpace.SMEM),          # params
            pl.BlockSpec((1, tile_r, _LANES), lambda b, t: (b, t, 0)),  # depth
        ],
        out_specs=pl.BlockSpec((1, tile_r, _LANES), lambda b, t: (b, t, 0)),
    )

    z_flat = pl.pallas_call(
        _make_z_kernel(W),
        grid_spec=grid_spec,
        out_shape=jax.ShapeDtypeStruct((B, r_pad, _LANES), jnp.float32),
        compiler_params=pltpu.CompilerParams(
            dimension_semantics=("parallel", "parallel")),
    )(params, depth_flat)

    z_near = z_flat.reshape(B, r_pad * _LANES)[:, :P].reshape(B, H, W)

    # ---- point sampling + |diff| mean in plain JAX (N-point gather) -----------
    b_idx = jnp.arange(B)[:, None]
    u_c = pts_for_loss[:, :, 0]
    v_c = pts_for_loss[:, :, 1]
    u_n = pts_for_loss_near[:, :, 0]
    v_n = pts_for_loss_near[:, :, 1]
    z_samp = z_near[b_idx, v_c, u_c]
    p_samp = pred_near[:, 0][b_idx, v_n, u_n]
    loss = jnp.mean(jnp.abs(p_samp - z_samp))

    return loss, z_near[:, None]          # Z_near as (B, 1, H, W)


def _reference(pts, pts_near, pred, pred_near, R, t, K):
    """Pure-JAX reference of the intended forward semantics."""
    B, _, H, W = pred.shape
    fu, fv, cu, cv = K[0, 0], K[1, 1], K[0, 2], K[1, 2]
    U = jnp.broadcast_to(jnp.arange(W, dtype=jnp.float32), (H, W))
    V = jnp.broadcast_to(jnp.arange(H, dtype=jnp.float32)[:, None], (H, W))
    X_cam = (U - cu) / fu
    Y_cam = (V - cv) / fv
    pc = jnp.concatenate([pred * X_cam, pred * Y_cam, pred], axis=1)   # (B,3,H,W)
    XYZ = jnp.einsum('bij,bjhw->bihw', R, pc)
    Z = XYZ[:, 2] + t[:, 2][:, None, None]                             # (B,H,W)
    pn = pred_near[:, 0]
    b_idx = jnp.arange(B)[:, None]
    z_samp = Z[b_idx, pts[:, :, 1], pts[:, :, 0]]
    p_samp = pn[b_idx, pts_near[:, :, 1], pts_near[:, :, 0]]
    return jnp.mean(jnp.abs(p_samp - z_samp)), Z


if __name__ == "__main__":
    B, H, W, N = 2, 16, 16, 8
    key = jax.random.PRNGKey(0)
    k0, k1, k2, k3, k4, k5 = jax.random.split(key, 6)

    pred = jax.random.uniform(k0, (B, 1, H, W), jnp.float32, 1.0, 5.0)
    pred_near = jax.random.uniform(k1, (B, 1, H, W), jnp.float32, 1.0, 5.0)
    R_mat = (jnp.broadcast_to(jnp.eye(3, dtype=jnp.float32), (B, 3, 3))
             + 0.01 * jax.random.normal(k2, (B, 3, 3), jnp.float32))
    t_vec = 0.1 * jax.random.normal(k3, (B, 3), jnp.float32)
    proj_k = jnp.array([[100.0, 0.0, W / 2.0],
                        [0.0, 100.0, H / 2.0],
                        [0.0, 0.0, 1.0]], jnp.float32)
    pts_for_loss = jax.random.randint(k4, (B, N, 2), 0, min(H, W)).astype(jnp.int32)
    pts_for_loss_near = jax.random.randint(k5, (B, N, 2), 0, min(H, W)).astype(jnp.int32)

    loss, z_near = jax.jit(covisual_loss)(
        pts_for_loss, pts_for_loss_near, pred, pred_near, R_mat, t_vec, proj_k)
    loss = jax.block_until_ready(loss)
    z_near = jax.block_until_ready(z_near)

    ref_loss, ref_z = _reference(pts_for_loss, pts_for_loss_near, pred, pred_near,
                                 R_mat, t_vec, proj_k)
    assert jnp.allclose(loss, ref_loss, rtol=1e-4, atol=1e-4), (loss, ref_loss)
    assert jnp.allclose(z_near[:, 0], ref_z, rtol=1e-4, atol=1e-4)
    print("KERNEL_OK")
</pallas_src>

<mosaic_0001>
module attributes {stable_mosaic.version = 11 : i64} {
  func.func @kernel(%arg0: i32, %arg1: i32, %arg2: memref<2x8xf32, #tpu.memory_space<smem>>, %arg3: memref<1x8x128xf32, #tpu.memory_space<vmem>>, %arg4: memref<1x8x128xf32, #tpu.memory_space<vmem>>) attributes {dimension_semantics = [#tpu.dimension_semantics<parallel>, #tpu.dimension_semantics<parallel>], iteration_bounds = array<i64: 2, 1>, scalar_prefetch = 0 : i64, scratch_operands = 0 : i64, tpu.core_type = #tpu.core_type<tc>, window_params = [{transform_indices = @transform_0, window_bounds = array<i64: 2, 8>}, {transform_indices = @transform_1, window_bounds = array<i64: 1, 8, 128>}, {transform_indices = @transform_2, window_bounds = array<i64: 1, 8, 128>}]} {
    %0 = arith.index_cast %arg0 : i32 to index
    %c0 = arith.constant 0 : index
    %1 = memref.load %arg2[%0, %c0] : memref<2x8xf32, #tpu.memory_space<smem>>
    %2 = arith.index_cast %arg0 : i32 to index
    %c1 = arith.constant 1 : index
    %3 = memref.load %arg2[%2, %c1] : memref<2x8xf32, #tpu.memory_space<smem>>
    %4 = arith.index_cast %arg0 : i32 to index
    %c2 = arith.constant 2 : index
    %5 = memref.load %arg2[%4, %c2] : memref<2x8xf32, #tpu.memory_space<smem>>
    %6 = arith.index_cast %arg0 : i32 to index
    %c3 = arith.constant 3 : index
    %7 = memref.load %arg2[%6, %c3] : memref<2x8xf32, #tpu.memory_space<smem>>
    %8 = arith.index_cast %arg0 : i32 to index
    %c4 = arith.constant 4 : index
    %9 = memref.load %arg2[%8, %c4] : memref<2x8xf32, #tpu.memory_space<smem>>
    %10 = arith.index_cast %arg0 : i32 to index
    %c5 = arith.constant 5 : index
    %11 = memref.load %arg2[%10, %c5] : memref<2x8xf32, #tpu.memory_space<smem>>
    %12 = arith.index_cast %arg0 : i32 to index
    %c6 = arith.constant 6 : index
    %13 = memref.load %arg2[%12, %c6] : memref<2x8xf32, #tpu.memory_space<smem>>
    %14 = arith.index_cast %arg0 : i32 to index
    %c7 = arith.constant 7 : index
    %15 = memref.load %arg2[%14, %c7] : memref<2x8xf32, #tpu.memory_space<smem>>
    %16 = tpu.iota {dimensions = array<i32: 0>} : vector<8x128xi32>
    %17 = tpu.iota {dimensions = array<i32: 1>} : vector<8x128xi32>
    %c1024_i32 = arith.constant 1024 : i32
    %18 = arith.muli %arg1, %c1024_i32 : i32
    %c128_i32 = arith.constant 128 : i32
    %19 = vector.broadcast %c128_i32 : i32 to vector<8x128xi32>
    %20 = arith.muli %16, %19 : vector<8x128xi32>
    %21 = vector.broadcast %18 : i32 to vector<8x128xi32>
    %22 = arith.addi %21, %20 : vector<8x128xi32>
    %23 = arith.addi %22, %17 : vector<8x128xi32>
    %24 = arith.sitofp %23 : vector<8x128xi32> to vector<8x128xf32>
    %cst = arith.constant 6.250000e-02 : f32
    %25 = vector.broadcast %cst : f32 to vector<8x128xf32>
    %26 = arith.mulf %24, %25 : vector<8x128xf32>
    %27 = math.floor %26 : vector<8x128xf32>
    %cst_0 = arith.constant 1.600000e+01 : f32
    %28 = vector.broadcast %cst_0 : f32 to vector<8x128xf32>
    %29 = arith.mulf %27, %28 : vector<8x128xf32>
    %30 = arith.subf %24, %29 : vector<8x128xf32>
    %cst_1 = arith.constant 1.600000e+01 : f32
    %31 = vector.broadcast %cst_1 : f32 to vector<8x128xf32>
    %32 = arith.cmpf oge, %30, %31 : vector<8x128xf32>
    %cst_2 = arith.constant 1.000000e+00 : f32
    %33 = vector.broadcast %cst_2 : f32 to vector<8x128xf32>
    %34 = arith.addf %27, %33 : vector<8x128xf32>
    %35 = arith.select %32, %34, %27 : vector<8x128xi1>, vector<8x128xf32>
    %cst_3 = arith.constant 1.600000e+01 : f32
    %36 = vector.broadcast %cst_3 : f32 to vector<8x128xf32>
    %37 = arith.subf %30, %36 : vector<8x128xf32>
    %38 = arith.select %32, %37, %30 : vector<8x128xi1>, vector<8x128xf32>
    %cst_4 = arith.constant 0.000000e+00 : f32
    %39 = vector.broadcast %cst_4 : f32 to vector<8x128xf32>
    %40 = arith.cmpf olt, %38, %39 : vector<8x128xf32>
    %cst_5 = arith.constant 1.000000e+00 : f32
    %41 = vector.broadcast %cst_5 : f32 to vector<8x128xf32>
    %42 = arith.subf %35, %41 : vector<8x128xf32>
    %43 = arith.select %40, %42, %35 : vector<8x128xi1>, vector<8x128xf32>
    %cst_6 = arith.constant 1.600000e+01 : f32
    %44 = vector.broadcast %cst_6 : f32 to vector<8x128xf32>
    %45 = arith.addf %38, %44 : vector<8x128xf32>
    %46 = arith.select %40, %45, %38 : vector<8x128xi1>, vector<8x128xf32>
    %47 = vector.broadcast %13 : f32 to vector<8x128xf32>
    %48 = arith.subf %46, %47 : vector<8x128xf32>
    %49 = vector.broadcast %9 : f32 to vector<8x128xf32>
    %50 = arith.mulf %48, %49 : vector<8x128xf32>
    %51 = vector.broadcast %15 : f32 to vector<8x128xf32>
    %52 = arith.subf %43, %51 : vector<8x128xf32>
    %53 = vector.broadcast %11 : f32 to vector<8x128xf32>
    %54 = arith.mulf %52, %53 : vector<8x128xf32>
    %c0_7 = arith.constant 0 : index
    %c0_8 = arith.constant 0 : index
    %c0_9 = arith.constant 0 : index
    %55 = vector.load %arg3[%c0_7, %c0_8, %c0_9] : memref<1x8x128xf32, #tpu.memory_space<vmem>>, vector<1x8x128xf32>
    %56 = vector.shape_cast %55 : vector<1x8x128xf32> to vector<8x128xf32>
    %57 = vector.broadcast %1 : f32 to vector<8x128xf32>
    %58 = arith.mulf %57, %50 : vector<8x128xf32>
    %59 = vector.broadcast %3 : f32 to vector<8x128xf32>
    %60 = arith.mulf %59, %54 : vector<8x128xf32>
    %61 = arith.addf %58, %60 : vector<8x128xf32>
    %62 = vector.broadcast %5 : f32 to vector<8x128xf32>
    %63 = arith.addf %61, %62 : vector<8x128xf32>
    %64 = arith.mulf %56, %63 : vector<8x128xf32>
    %65 = vector.broadcast %7 : f32 to vector<8x128xf32>
    %66 = arith.addf %64, %65 : vector<8x128xf32>
    %c0_10 = arith.constant 0 : index
    %c0_11 = arith.constant 0 : index
    %c0_12 = arith.constant 0 : index
    %67 = vector.load %arg4[%c0_10, %c0_11, %c0_12] : memref<1x8x128xf32, #tpu.memory_space<vmem>>, vector<1x8x128xf32>
    %68 = vector.shape_cast %67 : vector<1x8x128xf32> to vector<8x128xf32>
    %69 = vector.shape_cast %66 : vector<8x128xf32> to vector<1x8x128xf32>
    tpu.vector_store %arg4[%c0_10, %c0_11, %c0_12], %69 {strides = array<i32>} : memref<1x8x128xf32, #tpu.memory_space<vmem>>, vector<1x8x128xf32>,
    return
  }
  func.func @transform_0(%arg0: i32, %arg1: i32) -> (i32, i32) {
    %c0_i32 = arith.constant 0 : i32
    %c0_i32_0 = arith.constant 0 : i32
    %c0_i32_1 = arith.constant 0 : i32
    return %c0_i32, %c0_i32_0 : i32, i32
  }
  func.func @transform_1(%arg0: i32, %arg1: i32) -> (i32, i32, i32) {
    %c0_i32 = arith.constant 0 : i32
    %c0_i32_0 = arith.constant 0 : i32
    return %arg0, %arg1, %c0_i32 : i32, i32, i32
  }
  func.func @transform_2(%arg0: i32, %arg1: i32) -> (i32, i32, i32) {
    %c0_i32 = arith.constant 0 : i32
    %c0_i32_0 = arith.constant 0 : i32
    return %arg0, %arg1, %c0_i32 : i32, i32, i32
  }
}

</mosaic_0001>

<llo_original>
// kernel: squeeze.13
$region0: #{squeeze.13}
  %s0 = inlined_call_operand.vmem [shape: f32[2,1,16,16], index: 0, kind: input, shape index: {}]
  %s1 = inlined_call_operand.vmem [shape: f32[2,256], index: 1, kind: output, shape index: {}]
  $region1: #{squeeze.13} parent=0
    #allocation0 [shape = 'u8[8192]{0}', space=vmem, size = 0x2000, scoped, tag = 'scoped mem for output reshape']
    %v2 = vld [vmem:[%s0] ss:$8 sm:$0xf]
    %vm3 = vcmask 130048
    %4 = vst.msk [vmem:[#allocation0] ss:$8 sm:$0x3] %vm3, %v2
    %s5 = scalar_lea.vmem [#allocation0], 4294967281
    %6 = vst.msk [vmem:[%s5] ss:$8 sm:$0xc] %vm3, %v2
    %s7 = scalar_lea.vmem %s0, 7
    %s8 = smov 3
    %v9 = vld [vmem:[%s7] ss:$16 sm:%s8]
    %s10 = scalar_lea.vmem %s0, 4294967279
    %s11 = smov 12
    %v12 = vld [vmem:[%s10] ss:$16 sm:%s11]
    %vm13 = vcmask 1043458
    %v14 = vsel %vm13, %v12, %v9
    %15 = vrot.lane.b32.xlu0 %v14, 112
    %v16 = vpop.permute.xlu0 %15
    %vm17 = vcmask 1048448
    %18 = vst.msk [vmem:[#allocation0] sm:$0x3] %vm17, %v16
    %s19 = scalar_lea.vmem [#allocation0], 6
    %20 = vst.msk [vmem:[%s19] sm:$0xc] %vm17, %v16
    %s21 = scalar_lea.vmem %s0, 6
    %s22 = smov 3
    %v23 = vld [vmem:[%s21] ss:$16 sm:%s22]
    %s24 = scalar_lea.vmem %s0, 4294967278
    %s25 = smov 12
    %v26 = vld [vmem:[%s24] ss:$16 sm:%s25]
    %vm27 = vcmask 1043458
    %v28 = vsel %vm27, %v26, %v23
    %29 = vrot.lane.b32.xlu0 %v28, 96
    %v30 = vpop.permute.xlu0 %29
    %vm31 = vcmask 917248
    %32 = vst.msk [vmem:[#allocation0] sm:$0x3] %vm31, %v30
    %s33 = scalar_lea.vmem [#allocation0], 6
    %34 = vst.msk [vmem:[%s33] sm:$0xc] %vm31, %v30
    %s35 = scalar_lea.vmem %s0, 5
    %s36 = smov 3
    %v37 = vld [vmem:[%s35] ss:$16 sm:%s36]
    %s38 = scalar_lea.vmem %s0, 4294967277
    %s39 = smov 12
    %v40 = vld [vmem:[%s38] ss:$16 sm:%s39]
    %vm41 = vcmask 1043458
    %v42 = vsel %vm41, %v40, %v37
    %43 = vrot.lane.b32.xlu0 %v42, 80
    %v44 = vpop.permute.xlu0 %43
    %vm45 = vcmask 786048
    %46 = vst.msk [vmem:[#allocation0] sm:$0x3] %vm45, %v44
    %s47 = scalar_lea.vmem [#allocation0], 6
    %48 = vst.msk [vmem:[%s47] sm:$0xc] %vm45, %v44
    %s49 = scalar_lea.vmem %s0, 4
    %s50 = smov 3
    %v51 = vld [vmem:[%s49] ss:$16 sm:%s50]
    %s52 = scalar_lea.vmem %s0, 4294967276
    %s53 = smov 12
    %v54 = vld [vmem:[%s52] ss:$16 sm:%s53]
    %vm55 = vcmask 1043458
    %v56 = vsel %vm55, %v54, %v51
    %57 = vrot.lane.b32.xlu0 %v56, 64
    %v58 = vpop.permute.xlu0 %57
    %vm59 = vcmask 654848
    %60 = vst.msk [vmem:[#allocation0] sm:$0x3] %vm59, %v58
    %s61 = scalar_lea.vmem [#allocation0], 6
    %62 = vst.msk [vmem:[%s61] sm:$0xc] %vm59, %v58
    %s63 = scalar_lea.vmem %s0, 3
    %s64 = smov 3
    %v65 = vld [vmem:[%s63] ss:$16 sm:%s64]
    %s66 = scalar_lea.vmem %s0, 4294967275
    %s67 = smov 12
    %v68 = vld [vmem:[%s66] ss:$16 sm:%s67]
    %vm69 = vcmask 1043458
    %v70 = vsel %vm69, %v68, %v65
    %71 = vrot.lane.b32.xlu0 %v70, 48
    %v72 = vpop.permute.xlu0 %71
    %vm73 = vcmask 523648
    %74 = vst.msk [vmem:[#allocation0] sm:$0x3] %vm73, %v72
    %s75 = scalar_lea.vmem [#allocation0], 6
    %76 = vst.msk [vmem:[%s75] sm:$0xc] %vm73, %v72
    %s77 = scalar_lea.vmem %s0, 2
    %s78 = smov 3
    %v79 = vld [vmem:[%s77] ss:$16 sm:%s78]
    %s80 = scalar_lea.vmem %s0, 4294967274
    %s81 = smov 12
    %v82 = vld [vmem:[%s80] ss:$16 sm:%s81]
    %vm83 = vcmask 1043458
    %v84 = vsel %vm83, %v82, %v79
    %85 = vrot.lane.b32.xlu0 %v84, 32
    %v86 = vpop.permute.xlu0 %85
    %vm87 = vcmask 392448
    %88 = vst.msk [vmem:[#allocation0] sm:$0x3] %vm87, %v86
    %s89 = scalar_lea.vmem [#allocation0], 6
    %90 = vst.msk [vmem:[%s89] sm:$0xc] %vm87, %v86
    %s91 = scalar_lea.vmem %s0, 1
    %s92 = smov 3
    %v93 = vld [vmem:[%s91] ss:$16 sm:%s92]
    %s94 = scalar_lea.vmem %s0, 4294967273
    %s95 = smov 12
    %v96 = vld [vmem:[%s94] ss:$16 sm:%s95]
    %vm97 = vcmask 1043458
    %v98 = vsel %vm97, %v96, %v93
    %99 = vrot.lane.b32.xlu0 %v98, 16
    %v100 = vpop.permute.xlu0 %99
    %vm101 = vcmask 261248
    %102 = vst.msk [vmem:[#allocation0] sm:$0x3] %vm101, %v100
    %s103 = scalar_lea.vmem [#allocation0], 6
    %104 = vst.msk [vmem:[%s103] sm:$0xc] %vm101, %v100
    %s106 = sshll.u32 1, 2
    %s107 = ssub.s32 %s106, 1
    %v109 = vld [vmem:[#allocation0] sm:%s107]
    %s110 = sshll.u32 1, 2
    %s111 = ssub.s32 %s110, 1
    %112 = vst [vmem:[%s1] sm:%s111] %v109
    %s113 = scalar_lea.vmem [#allocation0], 8
    %v114 = vld [vmem:[%s113] sm:%s107]
    %s115 = sshll.u32 1, 2
    %s116 = ssub.s32 %s115, 1
    %s117 = scalar_lea.vmem %s1, 2
    %118 = vst [vmem:[%s117] sm:%s116] %v114

// kernel: covisual_loss.1
$region0: #{covisual_loss.1}
  #allocation0 [shape = 'u32[]', space=smem, size = 0x4, offset = 0x4, fixed_abs, tag = 'smem constant byte address 0x4 - core index']
  #allocation1 [shape = 'u32[144,128]{1,0:T(1,128)}', space=vmem, size = 0x12000, scoped, tag = 'internal scratch']
  %s0 = inlined_call_operand.vmem [shape: f32[2,8], index: 0, kind: input, shape index: {}]
  %s1 = inlined_call_operand.vmem [shape: f32[2,8,128], index: 1, kind: input, shape index: {}]
  %s2 = inlined_call_operand.vmem [shape: f32[2,8,128], index: 2, kind: output, shape index: {}]
  %s3 = sld [smem:[#allocation0]]
  $region45: #{covisual_loss.1} parent=0
    _
  %s5 = ssub.s32 1, %s3
  %s6 = scalar_select 0, %s5, %s3
  $region1: #{covisual_loss.1} parent=0
    #allocation2 [shape = 'u8[1024]{0}', space=smem, size = 0x400, scoped, tag = 'input window, operand 0, single buffered']
    #allocation3 [shape = 's32[2]{0}', space=sflag, size = 0x8, scoped, tag = 'scoped memory for covisual_loss.1']
    %7 = vsyncpa [#allocation3], 0
    loop: start=0, step=1, limit=4
    $region2: #{covisual_loss.1} parent=1 // loop_pre_header
      _
    $region3: #{covisual_loss.1} parent=1 // loop_header
      %s9 = sphi 0, %s13
      %p10 = scmp.ge.s32.totalorder %s9, 4
      %s16 = sphi 0, %s28
      %s17 = sphi 0, %s24
      %s18 = sphi 0, %s16
      %s19 = sphi 0, %s17
      %s20 = sphi 0, %s18
      %s21 = sphi 0, %s19
      %s29 = sphi 0, %s29
      %s31 = sphi 0, %s29
      %s32 = sphi 0, %s31
      %s46 = sphi 0, %s32
      %s54 = sphi 0, %s56
      %s57 = sphi 0, %s54
      %s58 = sphi 0, %s57
      %s74 = sphi 0, %s58
      %s82 = sphi 0, %s84
      %s85 = sphi 0, %s82
      %s86 = sphi 0, %s85
      %s102 = sphi 0, %s86
    $region4: #{covisual_loss.1} parent=1 // loop_header_branch
      %12 = sbr.rel (%p10) target = $region8
    $region5: #{covisual_loss.1} parent=1 // loop_body
      %s14 = ssub.s32 %s9, 1
      %s15 = ssub.s32 %s9, 2
      %s22 = sadd.s32 1, %s17
      %p23 = scmp.ge.s32.totalorder %s22, 1
      %s24 = scalar_select %p23, 0, %s22
      %s25 = sadd.s32 1, %s16
      %s26 = scalar_select %p23, %s25, %s16
      %p27 = scmp.ge.s32.totalorder %s26, 2
      %s28 = scalar_select %p27, 0, %s26
      %s30 = sadd.s32 %s29, 1
      %p33 = scmp.eq.s32.totalorder %s9, 1
      %p34 = scmp.ne.s32.totalorder %s29, %s31
      %p35 = scmp.eq.s32.totalorder %s9, 0
      %p36 = por %p34, %p35
      %p37 = scmp.ne.s32.totalorder %s29, %s31
      %p38 = scmp.eq.s32.totalorder %s14, 1
      %p39 = por %p37, %p38
      %p40 = scmp.ne.s32.totalorder %s31, %s32
      %p41 = scmp.eq.s32.totalorder %s14, 0
      %p42 = por %p40, %p41
      %p43 = scmp.ne.s32.totalorder %s31, %s32
      %p44 = scmp.eq.s32.totalorder %s15, 1
      %p45 = por %p43, %p44
      %p47 = scmp.ne.s32.totalorder %s32, %s46
      %p48 = scmp.eq.s32.totalorder %s15, 0
      %p49 = por %p47, %p48
      %s50 = ssub.s32 %s16, %s28
      %s51 = ssub.s32 %s17, %s24
      %s52 = sor.u32 %s50, %s51
      %p53 = scmp.eq.s32.totalorder %s52, 0
      %s55 = sadd.s32 %s54, 1
      %s56 = scalar_select %p53, %s54, %s55
      %p59 = pneg %p53
      %p60 = scmp.eq.s32.totalorder %s9, 1
      %p61 = por %p59, %p60
      %p62 = scmp.ne.s32.totalorder %s54, %s57
      %p63 = scmp.eq.s32.totalorder %s9, 0
      %p64 = por %p62, %p63
      %p65 = scmp.ne.s32.totalorder %s54, %s57
      %p66 = scmp.eq.s32.totalorder %s14, 1
      %p67 = por %p65, %p66
      %p68 = scmp.ne.s32.totalorder %s57, %s58
      %p69 = scmp.eq.s32.totalorder %s14, 0
      %p70 = por %p68, %p69
      %p71 = scmp.ne.s32.totalorder %s57, %s58
      %p72 = scmp.eq.s32.totalorder %s15, 1
      %p73 = por %p71, %p72
      %p75 = scmp.ne.s32.totalorder %s58, %s74
      %p76 = scmp.eq.s32.totalorder %s15, 0
      %p77 = por %p75, %p76
      %s78 = ssub.s32 %s16, %s28
      %s79 = ssub.s32 %s17, %s24
      %s80 = sor.u32 %s78, %s79
      %p81 = scmp.eq.s32.totalorder %s80, 0
      %s83 = sadd.s32 %s82, 1
      %s84 = scalar_select %p81, %s82, %s83
      %p87 = pneg %p81
      %p88 = scmp.eq.s32.totalorder %s9, 1
      %p89 = por %p87, %p88
      %p90 = scmp.ne.s32.totalorder %s82, %s85
      %p91 = scmp.eq.s32.totalorder %s9, 0
      %p92 = por %p90, %p91
      %p93 = scmp.ne.s32.totalorder %s82, %s85
      %p94 = scmp.eq.s32.totalorder %s14, 1
      %p95 = por %p93, %p94
      %p96 = scmp.ne.s32.totalorder %s85, %s86
      %p97 = scmp.eq.s32.totalorder %s14, 0
      %p98 = por %p96, %p97
      %p99 = scmp.ne.s32.totalorder %s85, %s86
      %p100 = scmp.eq.s32.totalorder %s15, 1
      %p101 = por %p99, %p100
      %p103 = scmp.ne.s32.totalorder %s86, %s102
      %p104 = scmp.eq.s32.totalorder %s15, 0
      %p105 = por %p103, %p104
      %p106 = scmp.le.s32.totalorder 1, %s9
      %p107 = scmp.lt.s32.totalorder %s9, 3
      %p108 = pnand %p106, %p107
      %p109 = pneg %p108
      // Predicated region
      $region9: #{covisual_loss.1} parent=5 // pred_check
        _
      $region10: #{covisual_loss.1} parent=5 // pred_check_branch
        %111 = sbr.rel (%p108) target = $region12
      $region11: #{covisual_loss.1} parent=5 // pred_region
        %s112 = ssub.s32 %s9, 1
        // Predicated region
        $region13: #{covisual_loss.1} parent=11 // pred_check
          %p113 = pneg %p42
        $region14: #{covisual_loss.1} parent=11 // pred_check_branch
          %115 = sbr.rel (%p113) target = $region16
        $region15: #{covisual_loss.1} parent=11 // pred_region
          %s117 = ssub.s32 32, 32
          %118 = vsyncadd [#allocation3], %s117
          %s120 = sshll.u32 %s0, 4
          %s121 = int_to_ptr.vmem [resolvable:$true] %s120
          %123 = dma.vmem_to_smem %s121, 32, [#allocation2], [#allocation3]
        $region16: #{covisual_loss.1} parent=11 // pred_fallthru
          _
      $region12: #{covisual_loss.1} parent=5 // pred_fallthru
        _
      %p124 = scmp.lt.s32.totalorder %s9, 2
      // Predicated region
      $region17: #{covisual_loss.1} parent=5 // pred_check
        %p125 = pneg %p124
      $region18: #{covisual_loss.1} parent=5 // pred_check_branch
        %127 = sbr.rel (%p125) target = $region20
      $region19: #{covisual_loss.1} parent=5 // pred_region
        // Predicated region
        $region21: #{covisual_loss.1} parent=19 // pred_check
          %p128 = pneg %p64
        $region22: #{covisual_loss.1} parent=19 // pred_check_branch
          %130 = sbr.rel (%p128) target = $region24
        $region23: #{covisual_loss.1} parent=19 // pred_region
          %p131 = scmp.lt.s32.totalorder %s16, 1
          %s132 = scalar_select %p131, %s16, 1
          %p133 = scmp.lt.s32.totalorder %s17, 0
          %s134 = scalar_select %p133, %s17, 0
          %s135 = sadd.s32 %s134, %s132
          %s136 = smul.addr %s135, 8
          %s137 = scalar_lea.vmem %s1, %s136
        $region24: #{covisual_loss.1} parent=19 // pred_fallthru
          _
      $region20: #{covisual_loss.1} parent=5 // pred_fallthru
        _
      %p138 = scmp.le.s32.totalorder 1, %s9
      %p139 = scmp.lt.s32.totalorder %s9, 3
      %p140 = pnand %p138, %p139
      %p141 = pneg %p140
      // Predicated region
      $region25: #{covisual_loss.1} parent=5 // pred_check
        _
      $region26: #{covisual_loss.1} parent=5 // pred_check_branch
        %143 = sbr.rel (%p140) target = $region28
      $region27: #{covisual_loss.1} parent=5 // pred_region
        %s144 = ssub.s32 %s9, 1
        // Predicated region
        $region29: #{covisual_loss.1} parent=27 // pred_check
          %p145 = pneg %p42
        $region30: #{covisual_loss.1} parent=27 // pred_check_branch
          %147 = sbr.rel (%p145) target = $region32
        $region31: #{covisual_loss.1} parent=27 // pred_region
          %148 = dma.done [#allocation3], 32
        $region32: #{covisual_loss.1} parent=27 // pred_fallthru
          _
        %149 = sfence
        %p150 = pneg %p42
        %p151 = pneg %p39
        %p152 = scmp.lt.s32.totalorder %s18, 1
        %s153 = scalar_select %p152, %s18, 1
        %p154 = scmp.lt.s32.totalorder %s19, 0
        %s155 = scalar_select %p154, %s19, 0
        %s156 = sadd.s32 %s155, %s153
        %s157 = smul.addr %s156, 8
        %s158 = scalar_lea.vmem %s1, %s157
        %p159 = pneg %p70
        %p160 = pneg %p67
        %p161 = pneg %p98
        %p162 = pneg %p95
        %p163 = scmp.lt.s32.totalorder %s18, 1
        %s164 = scalar_select %p163, %s18, 1
        %p165 = scmp.lt.s32.totalorder %s19, 0
        %s166 = scalar_select %p165, %s19, 0
        %s167 = sadd.s32 %s166, %s164
        %s168 = smul.addr %s167, 8
        %s169 = scalar_lea.vmem %s2, %s168
        %p170 = scmp.lt.s32.totalorder %s18, 1
        %s171 = scalar_select %p170, %s18, 1
        %p172 = scmp.lt.s32.totalorder %s19, 0
        %s173 = scalar_select %p172, %s19, 0
        %s174 = sadd.s32 %s173, %s171
        %s175 = smul.addr %s174, 8
        %s176 = scalar_lea.vmem %s1, %s175
        %p177 = scmp.lt.s32.totalorder %s18, 1
        %s178 = scalar_select %p177, %s18, 1
        %p179 = scmp.lt.s32.totalorder %s19, 0
        %s180 = scalar_select %p179, %s19, 0
        %s181 = sadd.s32 %s180, %s178
        %s182 = smul.addr %s181, 8
        %s183 = scalar_lea.vmem %s2, %s182
        %s184 = smul.u32 %s18, 128
        %s185 = sld [smem:[#allocation2 + %s184]]
        %s186 = sadd.s32 %s184, 1
        %s187 = sld [smem:[#allocation2 + %s186]]
        %s188 = sadd.s32 %s184, 2
        %s189 = sld [smem:[#allocation2 + %s188]]
        %s190 = sadd.s32 %s184, 3
        %s191 = sld [smem:[#allocation2 + %s190]]
        %s192 = sadd.s32 %s184, 4
        %s193 = sld [smem:[#allocation2 + %s192]]
        %s194 = sadd.s32 %s184, 5
        %s195 = sld [smem:[#allocation2 + %s194]]
        %s196 = sadd.s32 %s184, 6
        %s197 = sld [smem:[#allocation2 + %s196]]
        %s198 = sadd.s32 %s184, 7
        %s199 = sld [smem:[#allocation2 + %s198]]
        %v200 = vlaneseq
        %v201 = vshrl.u32 %v200, 7
        %v202 = vlaneseq
        %v203 = vand.u32 %v202, 127
        %s204 = smul.u32 %s19, 1024
        %v205 = vmul.u32 %v201, 128
        %v206 = vstv %s204
        %v207 = vadd.s32 %v206, %v205
        %v208 = vadd.s32 %v207, %v203
        %v209 = vcvt.s32.f32 %v208
        %v210 = vmul.f32 %v209, 0.0625
        %v211 = vfloor.f32 %v210
        %v212 = vmul.f32 %v211, 16.0
        %v213 = vsub.f32 %v209, %v212
        %vm214 = vcmp.ge.f32.partialorder %v213, 16.0
        %v215 = vadd.f32 %v211, 1.0
        %v216 = vsel %vm214, %v215, %v211
        %v217 = vsub.f32 %v213, 16.0
        %v218 = vsel %vm214, %v217, %v213
        %vm219 = vcmp.lt.f32.partialorder %v218, 0.0
        %v220 = vsub.f32 %v216, 1.0
        %v221 = vsel %vm219, %v220, %v216
        %v222 = vadd.f32 %v218, 16.0
        %v223 = vsel %vm219, %v222, %v218
        %v224 = vstv %s197
        %v225 = vsub.f32 %v223, %v224
        %v226 = vstv %s193
        %v227 = vmul.f32 %v225, %v226
        %v228 = vstv %s199
        %v229 = vsub.f32 %v221, %v228
        %v230 = vstv %s195
        %v231 = vmul.f32 %v229, %v230
        %v232 = vld [vmem:[%s176] sm:$0xff]
        %v233 = vstv %s185
        %v234 = vmul.f32 %v233, %v227
        %v235 = vstv %s187
        %v236 = vmul.f32 %v235, %v231
        %v237 = vadd.f32 %v234, %v236
        %v238 = vstv %s189
        %v239 = vadd.f32 %v237, %v238
        %v240 = vmul.f32 %v232, %v239
        %v241 = vstv %s191
        %v242 = vadd.f32 %v240, %v241
        %243 = vst [vmem:[%s183] sm:$0xff] %v242
        %p244 = scmp.lt.s32.totalorder %s18, 1
        %s245 = scalar_select %p244, %s18, 1
        %p246 = scmp.lt.s32.totalorder %s19, 0
        %s247 = scalar_select %p246, %s19, 0
        %s248 = sadd.s32 %s247, %s245
        %s249 = smul.addr %s248, 8
        %s250 = scalar_lea.vmem %s2, %s249
        // Predicated region
        $region33: #{covisual_loss.1} parent=27 // pred_check
          %p251 = pneg %p95
        $region34: #{covisual_loss.1} parent=27 // pred_check_branch
          %253 = sbr.rel (%p251) target = $region36
        $region35: #{covisual_loss.1} parent=27 // pred_region
          _
        $region36: #{covisual_loss.1} parent=27 // pred_fallthru
          _
      $region28: #{covisual_loss.1} parent=5 // pred_fallthru
        _
      %p254 = scmp.le.s32.totalorder 2, %s9
      // Predicated region
      $region37: #{covisual_loss.1} parent=5 // pred_check
        %p255 = pneg %p254
      $region38: #{covisual_loss.1} parent=5 // pred_check_branch
        %257 = sbr.rel (%p255) target = $region40
      $region39: #{covisual_loss.1} parent=5 // pred_region
        %s258 = ssub.s32 %s9, 2
        // Predicated region
        $region41: #{covisual_loss.1} parent=39 // pred_check
          %p259 = pneg %p101
        $region42: #{covisual_loss.1} parent=39 // pred_check_branch
          %261 = sbr.rel (%p259) target = $region44
        $region43: #{covisual_loss.1} parent=39 // pred_region
          %p262 = scmp.lt.s32.totalorder %s20, 1
          %s263 = scalar_select %p262, %s20, 1
          %p264 = scmp.lt.s32.totalorder %s21, 0
          %s265 = scalar_select %p264, %s21, 0
          %s266 = sadd.s32 %s265, %s263
          %s267 = smul.addr %s266, 8
          %s268 = scalar_lea.vmem %s2, %s267
        $region44: #{covisual_loss.1} parent=39 // pred_fallthru
          _
      $region40: #{covisual_loss.1} parent=5 // pred_fallthru
        _
    $region6: #{covisual_loss.1} parent=1 // loop_footer
      %s13 = sadd.s32 1, %s9
    $region7: #{covisual_loss.1} parent=1 // loop_footer_branch
      %8 = sbr.rel target = $region3
    $region8: #{covisual_loss.1} parent=1 // loop_exit
      _
    %269 = vsyncpa [#allocation3], 1
    %s270 = scalar_lea.sflag [#allocation3], 1
    %271 = vsyncpa %s270, 1

</llo_original>
